<compile_context>
chip_gen: v7x
topology: tpu7x:2x2x1
jax: 0.10.0
libtpu: 0.0.40
codegen_flags: <defaults>
</compile_context>

<pallas_src>
import jax
import jax.numpy as jnp
from jax.experimental import pallas as pl
from jax.experimental.pallas import tpu as pltpu

HIDDEN = 32    # hidden_size
VOCAB = 64     # output_size
MAXLEN = 15    # max_length (MAX_LENGTH in the PyTorch file)
PACK = 128     # packed output lane width: [logp(64) | c_t(32) | attn_w(15) | pad]


def attn_decoder_kernel(
    toks_ref,                    # SMEM (T,) int32 : token ids (scalar prefetch)
    emb_ref,                     # (V, H)          : full embedding table (VMEM)
    hid0_ref,                    # (1, H)          : initial hidden state
    enc_ref,                     # (L, H)          : encoder_outputs
    w_first_ref,                 # (2H, 4H+L)      : [[0 ; W_g_hid] | W_attn]
    b_attn_ref,                  # (1, L)
    w_comb_ref, b_comb_ref,      # (2H, H), (1, H) : attn_combine
    w_gc_ref, b_g_ref,           # (H, 4H), (1, 4H): comb-half of stacked gates + bias
    w_out_ref, b_out_ref,        # (H, V), (1, V)  : out
    out_ref,                     # (T, PACK)       : packed [logp | c_t | attn_w | 0]
):
    H, V, L = HIDDEN, VOCAB, MAXLEN
    T = out_ref.shape[0]

    # ~70 KB of parameters: hoist the ref reads out of the timestep loop.
    enc = enc_ref[...]
    w_first = w_first_ref[...]
    b_attn = b_attn_ref[...]
    w_comb = w_comb_ref[...]
    b_comb = b_comb_ref[...]
    w_gc = w_gc_ref[...]
    b_g = b_g_ref[...]
    w_out = w_out_ref[...]
    b_out = b_out_ref[...]
    pad = jnp.zeros((1, PACK - V - H - L), jnp.float32)

    def step(t, hid):
        # embedding lookup from the VMEM-resident table (scalar token index)
        # TODO(synk): nn.Dropout on the embedding applied as identity (eval mode).
        emb = emb_ref[pl.ds(toks_ref[t], 1), :]                          # (1, H)

        # fused first dot: [emb | hid] @ [[0 ; W_g_hid] | W_attn]
        #   lanes 0:4H    -> hidden-state contribution to the LSTM gates
        #   lanes 4H:4H+L -> attention logits (pre-bias)
        first = jnp.dot(jnp.concatenate([emb, hid], axis=1), w_first,
                        preferred_element_type=jnp.float32)             # (1, 4H+L)
        gates_hid = first[:, 0:4 * H]
        att = first[:, 4 * H:4 * H + L] + b_attn

        # attn_weights = softmax(attn(cat(embedded, hidden)), dim=1)
        att = att - jnp.max(att, axis=1, keepdims=True)
        e = jnp.exp(att)
        attn_w = e * pl.reciprocal(jnp.sum(e, axis=1, keepdims=True), approx=True)

        # attn_applied = bmm(attn_weights, encoder_outputs)
        attn_applied = jnp.dot(attn_w, enc,
                               preferred_element_type=jnp.float32)      # (1, H)

        # output = attn_combine(cat(embedded, attn_applied))   (no nonlinearity)
        comb = (jnp.dot(jnp.concatenate([emb, attn_applied], axis=1), w_comb,
                        preferred_element_type=jnp.float32) + b_comb)   # (1, H)

        # LSTM gates: comb-half matmul + precomputed hidden-half contribution
        gates = (jnp.dot(comb, w_gc, preferred_element_type=jnp.float32)
                 + gates_hid + b_g)                                     # (1, 4H)
        i_t = jax.nn.sigmoid(gates[:, 0:H])
        f_t = jax.nn.sigmoid(gates[:, H:2 * H])
        g_t = jnp.tanh(gates[:, 2 * H:3 * H])
        o_t = jax.nn.sigmoid(gates[:, 3 * H:4 * H])

        c_t = f_t * hid + i_t * g_t                                     # (1, H)
        h_t = o_t * jnp.tanh(c_t)

        # output = log_softmax(out(h_t), dim=1)
        logits = (jnp.dot(h_t, w_out,
                          preferred_element_type=jnp.float32) + b_out)  # (1, V)
        shifted = logits - jnp.max(logits, axis=1, keepdims=True)
        logp = shifted - jnp.log(jnp.sum(jnp.exp(shifted), axis=1, keepdims=True))

        # single lane-dense packed (1,128) store for this step
        out_ref[pl.ds(t, 1), :] = jnp.concatenate([logp, c_t, attn_w, pad], axis=1)

        # recurrence: the seq2seq decode loop feeds the returned c_t back as `hidden`
        return c_t

    jax.lax.fori_loop(0, T, step, hid0_ref[...], unroll=True)


def attn_decoder_decode(tokens, params, hidden0, encoder_outputs):
    """Runs T decoder steps (teacher-forced token sequence) in ONE pallas_call.

    Step t consumes tokens[t] and the "hidden" returned by step t-1 (= c_{t-1},
    exactly what the seq2seq loop feeds back).  Returns (logp [T,V], c_t [T,H],
    attn_weights [T,L]).
    """
    (emb_tbl, w_attn, b_attn, w_comb, b_comb,
     w_i, b_i, w_f, b_f, w_c, b_c, w_o, b_o, w_out, b_out) = params
    H, V, L = HIDDEN, VOCAB, MAXLEN
    T = tokens.shape[0]

    # stacked gate weights:  combined(2H) @ w_g(2H,4H)  ==
    #   comb(H) @ w_g[:H,:]  +  hid(H) @ w_g[H:,:]
    w_g = jnp.concatenate([w_i, w_f, w_c, w_o], axis=1)        # (2H, 4H)
    b_g = jnp.concatenate([b_i, b_f, b_c, b_o], axis=1)        # (1, 4H)
    w_gc = w_g[:H, :]                                          # (H, 4H) comb half
    # fused first-dot weight: [emb|hid] @ [[0 ; W_g_hid] | W_attn]
    w_first = jnp.concatenate(
        [jnp.concatenate([jnp.zeros((H, 4 * H), jnp.float32), w_g[H:, :]], axis=0),
         w_attn],
        axis=1)                                                # (2H, 4H + L)

    def _c(shape):
        nd = len(shape)
        return pl.BlockSpec(shape, lambda i, toks, nd=nd: (0,) * nd)

    grid_spec = pltpu.PrefetchScalarGridSpec(
        num_scalar_prefetch=1,
        grid=(1,),                                   # whole sequence in one step
        in_specs=[
            _c((V, H)),                              # embedding table (VMEM-resident)
            _c((1, H)),                              # initial hidden
            _c((L, H)),                              # encoder_outputs
            _c((2 * H, 4 * H + L)), _c((1, L)),      # fused first-dot weight, attn bias
            _c((2 * H, H)), _c((1, H)),              # attn_combine
            _c((H, 4 * H)), _c((1, 4 * H)),          # comb-half gate weight, gate bias
            _c((H, V)), _c((1, V)),                  # out
        ],
        out_specs=pl.BlockSpec((T, PACK), lambda i, toks: (0, 0)),
    )

    packed = pl.pallas_call(
        attn_decoder_kernel,
        out_shape=jax.ShapeDtypeStruct((T, PACK), jnp.float32),
        grid_spec=grid_spec,
        compiler_params=pltpu.CompilerParams(
            dimension_semantics=("arbitrary",)),     # recurrent -> sequential
    )(tokens.astype(jnp.int32), emb_tbl, hidden0, encoder_outputs,
      w_first, b_attn, w_comb, b_comb, w_gc, b_g, w_out, b_out)

    logp = packed[:, 0:V]
    c_t = packed[:, V:V + H]
    attn_w = packed[:, V + H:V + H + L]
    return logp, c_t, attn_w


def attn_decoder_forward(tok, params, hidden, encoder_outputs):
    """Single decoder step == AttnDecoderRNN.forward (T=1 case of the fused kernel)."""
    return attn_decoder_decode(tok.reshape((1,)).astype(jnp.int32),
                               params, hidden, encoder_outputs)


def init_params(key):
    H, V, L = HIDDEN, VOCAB, MAXLEN
    ks = jax.random.split(key, 16)

    def lin_w(k, fan_in, shape):
        bound = 1.0 / float(fan_in) ** 0.5
        return jax.random.uniform(k, shape, jnp.float32, -bound, bound)

    emb_tbl = jax.random.normal(ks[0], (V, H), jnp.float32)
    w_attn = lin_w(ks[1], 2 * H, (2 * H, L)); b_attn = lin_w(ks[2], 2 * H, (1, L))
    w_comb = lin_w(ks[3], 2 * H, (2 * H, H)); b_comb = lin_w(ks[4], 2 * H, (1, H))
    w_i = lin_w(ks[5], 2 * H, (2 * H, H)); b_i = lin_w(ks[6], 2 * H, (1, H))
    w_f = lin_w(ks[7], 2 * H, (2 * H, H)); b_f = lin_w(ks[8], 2 * H, (1, H))
    w_c = lin_w(ks[9], 2 * H, (2 * H, H)); b_c = lin_w(ks[10], 2 * H, (1, H))
    w_o = lin_w(ks[11], 2 * H, (2 * H, H)); b_o = lin_w(ks[12], 2 * H, (1, H))
    w_out = lin_w(ks[13], H, (H, V)); b_out = lin_w(ks[14], H, (1, V))
    return (emb_tbl, w_attn, b_attn, w_comb, b_comb,
            w_i, b_i, w_f, b_f, w_c, b_c, w_o, b_o, w_out, b_out)


def reference_forward(tok, params, hidden, enc):
    # pure-JAX mirror of the PyTorch forward (dropout = identity / eval mode)
    (emb_tbl, w_attn, b_attn, w_comb, b_comb,
     w_i, b_i, w_f, b_f, w_c, b_c, w_o, b_o, w_out, b_out) = params
    emb = emb_tbl[tok]                                                # (1, H)
    attn_w = jax.nn.softmax(jnp.concatenate([emb, hidden], 1) @ w_attn + b_attn, axis=1)
    attn_applied = attn_w @ enc
    comb = jnp.concatenate([emb, attn_applied], 1) @ w_comb + b_comb
    combined = jnp.concatenate([comb, hidden], 1)
    i_t = jax.nn.sigmoid(combined @ w_i + b_i)
    f_t = jax.nn.sigmoid(combined @ w_f + b_f)
    g_t = jnp.tanh(combined @ w_c + b_c)
    o_t = jax.nn.sigmoid(combined @ w_o + b_o)
    c_t = f_t * hidden + i_t * g_t
    h_t = o_t * jnp.tanh(c_t)
    logp = jax.nn.log_softmax(h_t @ w_out + b_out, axis=1)
    return logp, c_t, attn_w


def reference_decode(tokens, params, hidden0, enc):
    hid = hidden0
    logps, cts, atts = [], [], []
    for i in range(tokens.shape[0]):
        logp, c_t, a = reference_forward(tokens[i:i + 1], params, hid, enc)
        logps.append(logp); cts.append(c_t); atts.append(a)
        hid = c_t                                    # same recurrence the loop uses
    return (jnp.concatenate(logps, 0), jnp.concatenate(cts, 0),
            jnp.concatenate(atts, 0))


if __name__ == "__main__":
    key = jax.random.PRNGKey(0)
    kp, kh, ke, kt = jax.random.split(key, 4)

    params = init_params(kp)
    hidden = jax.random.normal(kh, (1, HIDDEN), jnp.float32)     # hidden state
    enc = jax.random.normal(ke, (MAXLEN, HIDDEN), jnp.float32)   # encoder_outputs

    # --- single-step forward (matches AttnDecoderRNN.forward) ---
    tok = jnp.array([3], dtype=jnp.int32)
    logp, c_t, attn_w = attn_decoder_forward(tok, params, hidden, enc)
    jax.block_until_ready((logp, c_t, attn_w))

    logp_r, c_r, attn_r = reference_forward(tok, params, hidden, enc)
    assert jnp.allclose(logp, logp_r, atol=2e-3, rtol=2e-3), "log_softmax mismatch"
    assert jnp.allclose(c_t, c_r, atol=2e-3, rtol=2e-3), "c_t mismatch"
    assert jnp.allclose(attn_w, attn_r, atol=2e-3, rtol=2e-3), "attn_weights mismatch"

    # --- fused full-sequence decode: MAXLEN steps in one pallas_call, one grid step ---
    tokens = jax.random.randint(kt, (MAXLEN,), 0, VOCAB, dtype=jnp.int32)
    logp_s, c_s, attn_s = attn_decoder_decode(tokens, params, hidden, enc)
    jax.block_until_ready((logp_s, c_s, attn_s))

    logp_sr, c_sr, attn_sr = reference_decode(tokens, params, hidden, enc)
    assert jnp.allclose(logp_s, logp_sr, atol=2e-3, rtol=2e-3), "fused log_softmax mismatch"
    assert jnp.allclose(c_s, c_sr, atol=2e-3, rtol=2e-3), "fused c_t mismatch"
    assert jnp.allclose(attn_s, attn_sr, atol=2e-3, rtol=2e-3), "fused attn_weights mismatch"

    print("KERNEL_OK")
</pallas_src>

<mosaic_0001>
module attributes {stable_mosaic.version = 11 : i64} {
  func.func @attn_decoder_kernel(%arg0: i32, %arg1: memref<1xi32, #tpu.memory_space<smem>>, %arg2: memref<64x32xf32, #tpu.memory_space<vmem>>, %arg3: memref<1x32xf32, #tpu.memory_space<vmem>>, %arg4: memref<15x32xf32, #tpu.memory_space<vmem>>, %arg5: memref<64x143xf32, #tpu.memory_space<vmem>>, %arg6: memref<1x15xf32, #tpu.memory_space<vmem>>, %arg7: memref<64x32xf32, #tpu.memory_space<vmem>>, %arg8: memref<1x32xf32, #tpu.memory_space<vmem>>, %arg9: memref<32x128xf32, #tpu.memory_space<vmem>>, %arg10: memref<1x128xf32, #tpu.memory_space<vmem>>, %arg11: memref<32x64xf32, #tpu.memory_space<vmem>>, %arg12: memref<1x64xf32, #tpu.memory_space<vmem>>, %arg13: memref<1x128xf32, #tpu.memory_space<vmem>>) attributes {dimension_semantics = [#tpu.dimension_semantics<arbitrary>], iteration_bounds = array<i64: 1>, scalar_prefetch = 1 : i64, scratch_operands = 0 : i64, tpu.core_type = #tpu.core_type<tc>, window_params = [{pipeline_mode = #tpu.pipeline_mode<synchronous>, transform_indices = @transform_0, window_bounds = array<i64: 64, 32>}, {pipeline_mode = #tpu.pipeline_mode<synchronous>, transform_indices = @transform_1, window_bounds = array<i64: 1, 32>}, {pipeline_mode = #tpu.pipeline_mode<synchronous>, transform_indices = @transform_2, window_bounds = array<i64: 15, 32>}, {pipeline_mode = #tpu.pipeline_mode<synchronous>, transform_indices = @transform_3, window_bounds = array<i64: 64, 143>}, {pipeline_mode = #tpu.pipeline_mode<synchronous>, transform_indices = @transform_4, window_bounds = array<i64: 1, 15>}, {pipeline_mode = #tpu.pipeline_mode<synchronous>, transform_indices = @transform_5, window_bounds = array<i64: 64, 32>}, {pipeline_mode = #tpu.pipeline_mode<synchronous>, transform_indices = @transform_6, window_bounds = array<i64: 1, 32>}, {pipeline_mode = #tpu.pipeline_mode<synchronous>, transform_indices = @transform_7, window_bounds = array<i64: 32, 128>}, {pipeline_mode = #tpu.pipeline_mode<synchronous>, transform_indices = @transform_8, window_bounds = array<i64: 1, 128>}, {pipeline_mode = #tpu.pipeline_mode<synchronous>, transform_indices = @transform_9, window_bounds = array<i64: 32, 64>}, {pipeline_mode = #tpu.pipeline_mode<synchronous>, transform_indices = @transform_10, window_bounds = array<i64: 1, 64>}, {pipeline_mode = #tpu.pipeline_mode<synchronous>, transform_indices = @transform_11, window_bounds = array<i64: 1, 128>}]} {
    %c0 = arith.constant 0 : index
    %c0_0 = arith.constant 0 : index
    %0 = vector.load %arg4[%c0, %c0_0] : memref<15x32xf32, #tpu.memory_space<vmem>>, vector<15x32xf32>
    %c0_1 = arith.constant 0 : index
    %c0_2 = arith.constant 0 : index
    %1 = vector.load %arg5[%c0_1, %c0_2] : memref<64x143xf32, #tpu.memory_space<vmem>>, vector<64x143xf32>
    %c0_3 = arith.constant 0 : index
    %c0_4 = arith.constant 0 : index
    %2 = vector.load %arg6[%c0_3, %c0_4] : memref<1x15xf32, #tpu.memory_space<vmem>>, vector<1x15xf32>
    %c0_5 = arith.constant 0 : index
    %c0_6 = arith.constant 0 : index
    %3 = vector.load %arg7[%c0_5, %c0_6] : memref<64x32xf32, #tpu.memory_space<vmem>>, vector<64x32xf32>
    %c0_7 = arith.constant 0 : index
    %c0_8 = arith.constant 0 : index
    %4 = vector.load %arg8[%c0_7, %c0_8] : memref<1x32xf32, #tpu.memory_space<vmem>>, vector<1x32xf32>
    %c0_9 = arith.constant 0 : index
    %c0_10 = arith.constant 0 : index
    %5 = vector.load %arg9[%c0_9, %c0_10] : memref<32x128xf32, #tpu.memory_space<vmem>>, vector<32x128xf32>
    %c0_11 = arith.constant 0 : index
    %c0_12 = arith.constant 0 : index
    %6 = vector.load %arg10[%c0_11, %c0_12] : memref<1x128xf32, #tpu.memory_space<vmem>>, vector<1x128xf32>
    %c0_13 = arith.constant 0 : index
    %c0_14 = arith.constant 0 : index
    %7 = vector.load %arg11[%c0_13, %c0_14] : memref<32x64xf32, #tpu.memory_space<vmem>>, vector<32x64xf32>
    %c0_15 = arith.constant 0 : index
    %c0_16 = arith.constant 0 : index
    %8 = vector.load %arg12[%c0_15, %c0_16] : memref<1x64xf32, #tpu.memory_space<vmem>>, vector<1x64xf32>
    %cst = arith.constant 0.000000e+00 : f32
    %9 = vector.broadcast %cst : f32 to vector<1x17xf32>
    %c0_17 = arith.constant 0 : index
    %c0_18 = arith.constant 0 : index
    %10 = vector.load %arg3[%c0_17, %c0_18] : memref<1x32xf32, #tpu.memory_space<vmem>>, vector<1x32xf32>
    %c0_i32 = arith.constant 0 : i32
    %11 = arith.index_cast %c0_i32 : i32 to index
    %12 = memref.load %arg1[%11] : memref<1xi32, #tpu.memory_space<smem>>
    %13 = arith.index_cast %12 : i32 to index
    %c0_19 = arith.constant 0 : index
    %14 = vector.load %arg2[%13, %c0_19] : memref<64x32xf32, #tpu.memory_space<vmem>>, vector<1x32xf32>
    %15 = tpu.concatenate %14, %10 in 1 : vector<1x32xf32>, vector<1x32xf32> -> vector<1x64xf32>
    %cst_20 = arith.constant dense<0.000000e+00> : vector<1x143xf32>
    %16 = tpu.matmul %15, %1, %cst_20 {dimension_numbers = #tpu.dot_dimension_numbers<[1], [0], [0], [1], [0, 0, 1, 1], [], []>} : vector<1x64xf32>, vector<64x143xf32>, vector<1x143xf32> -> vector<1x143xf32>
    %17 = vector.extract_strided_slice %16 {offsets = [0, 0], sizes = [1, 128], strides = [1, 1]} : vector<1x143xf32> to vector<1x128xf32>
    %18 = vector.extract_strided_slice %16 {offsets = [0, 128], sizes = [1, 15], strides = [1, 1]} : vector<1x143xf32> to vector<1x15xf32>
    %19 = arith.addf %18, %2 : vector<1x15xf32>
    %cst_21 = arith.constant dense<0xFF800000> : vector<1xf32>
    %20 = vector.multi_reduction <maximumf>, %19, %cst_21 [1] : vector<1x15xf32> to vector<1xf32>
    %21 = vector.shape_cast %20 : vector<1xf32> to vector<1x1xf32>
    %22 = vector.broadcast %21 : vector<1x1xf32> to vector<1x15xf32>
    %23 = arith.subf %19, %22 : vector<1x15xf32>
    %24 = math.exp %23 : vector<1x15xf32>
    %cst_22 = arith.constant dense<0.000000e+00> : vector<1xf32>
    %25 = vector.multi_reduction <add>, %24, %cst_22 [1] : vector<1x15xf32> to vector<1xf32>
    %26 = vector.shape_cast %25 : vector<1xf32> to vector<1x1xf32>
    %27 = tpu.reciprocal %26 {approx = true} : vector<1x1xf32> -> vector<1x1xf32>
    %28 = vector.broadcast %27 : vector<1x1xf32> to vector<1x15xf32>
    %29 = arith.mulf %24, %28 : vector<1x15xf32>
    %cst_23 = arith.constant dense<0.000000e+00> : vector<1x32xf32>
    %30 = tpu.matmul %29, %0, %cst_23 {dimension_numbers = #tpu.dot_dimension_numbers<[1], [0], [0], [1], [0, 0, 1, 1], [], []>} : vector<1x15xf32>, vector<15x32xf32>, vector<1x32xf32> -> vector<1x32xf32>
    %31 = tpu.concatenate %14, %30 in 1 : vector<1x32xf32>, vector<1x32xf32> -> vector<1x64xf32>
    %cst_24 = arith.constant dense<0.000000e+00> : vector<1x32xf32>
    %32 = tpu.matmul %31, %3, %cst_24 {dimension_numbers = #tpu.dot_dimension_numbers<[1], [0], [0], [1], [0, 0, 1, 1], [], []>} : vector<1x64xf32>, vector<64x32xf32>, vector<1x32xf32> -> vector<1x32xf32>
    %33 = arith.addf %32, %4 : vector<1x32xf32>
    %cst_25 = arith.constant dense<0.000000e+00> : vector<1x128xf32>
    %34 = tpu.matmul %33, %5, %cst_25 {dimension_numbers = #tpu.dot_dimension_numbers<[1], [0], [0], [1], [0, 0, 1, 1], [], []>} : vector<1x32xf32>, vector<32x128xf32>, vector<1x128xf32> -> vector<1x128xf32>
    %35 = arith.addf %34, %17 : vector<1x128xf32>
    %36 = arith.addf %35, %6 : vector<1x128xf32>
    %37 = vector.extract_strided_slice %36 {offsets = [0, 0], sizes = [1, 32], strides = [1, 1]} : vector<1x128xf32> to vector<1x32xf32>
    %38 = arith.negf %37 : vector<1x32xf32>
    %39 = math.exp %38 : vector<1x32xf32>
    %cst_26 = arith.constant 1.000000e+00 : f32
    %40 = vector.broadcast %cst_26 : f32 to vector<1x32xf32>
    %41 = arith.addf %40, %39 : vector<1x32xf32>
    %42 = arith.divf %40, %41 : vector<1x32xf32>
    %43 = vector.extract_strided_slice %36 {offsets = [0, 32], sizes = [1, 32], strides = [1, 1]} : vector<1x128xf32> to vector<1x32xf32>
    %44 = arith.negf %43 : vector<1x32xf32>
    %45 = math.exp %44 : vector<1x32xf32>
    %cst_27 = arith.constant 1.000000e+00 : f32
    %46 = vector.broadcast %cst_27 : f32 to vector<1x32xf32>
    %47 = arith.addf %46, %45 : vector<1x32xf32>
    %48 = arith.divf %46, %47 : vector<1x32xf32>
    %49 = vector.extract_strided_slice %36 {offsets = [0, 64], sizes = [1, 32], strides = [1, 1]} : vector<1x128xf32> to vector<1x32xf32>
    %50 = math.tanh %49 : vector<1x32xf32>
    %51 = vector.extract_strided_slice %36 {offsets = [0, 96], sizes = [1, 32], strides = [1, 1]} : vector<1x128xf32> to vector<1x32xf32>
    %52 = arith.negf %51 : vector<1x32xf32>
    %53 = math.exp %52 : vector<1x32xf32>
    %cst_28 = arith.constant 1.000000e+00 : f32
    %54 = vector.broadcast %cst_28 : f32 to vector<1x32xf32>
    %55 = arith.addf %54, %53 : vector<1x32xf32>
    %56 = arith.divf %54, %55 : vector<1x32xf32>
    %57 = arith.mulf %48, %10 : vector<1x32xf32>
    %58 = arith.mulf %42, %50 : vector<1x32xf32>
    %59 = arith.addf %57, %58 : vector<1x32xf32>
    %60 = math.tanh %59 : vector<1x32xf32>
    %61 = arith.mulf %56, %60 : vector<1x32xf32>
    %cst_29 = arith.constant dense<0.000000e+00> : vector<1x64xf32>
    %62 = tpu.matmul %61, %7, %cst_29 {dimension_numbers = #tpu.dot_dimension_numbers<[1], [0], [0], [1], [0, 0, 1, 1], [], []>} : vector<1x32xf32>, vector<32x64xf32>, vector<1x64xf32> -> vector<1x64xf32>
    %63 = arith.addf %62, %8 : vector<1x64xf32>
    %cst_30 = arith.constant dense<0xFF800000> : vector<1xf32>
    %64 = vector.multi_reduction <maximumf>, %63, %cst_30 [1] : vector<1x64xf32> to vector<1xf32>
    %65 = vector.shape_cast %64 : vector<1xf32> to vector<1x1xf32>
    %66 = vector.broadcast %65 : vector<1x1xf32> to vector<1x64xf32>
    %67 = arith.subf %63, %66 : vector<1x64xf32>
    %68 = math.exp %67 : vector<1x64xf32>
    %cst_31 = arith.constant dense<0.000000e+00> : vector<1xf32>
    %69 = vector.multi_reduction <add>, %68, %cst_31 [1] : vector<1x64xf32> to vector<1xf32>
    %70 = vector.shape_cast %69 : vector<1xf32> to vector<1x1xf32>
    %71 = math.log %70 : vector<1x1xf32>
    %72 = vector.broadcast %71 : vector<1x1xf32> to vector<1x64xf32>
    %73 = arith.subf %67, %72 : vector<1x64xf32>
    %74 = tpu.concatenate %73, %59, %29, %9 in 1 : vector<1x64xf32>, vector<1x32xf32>, vector<1x15xf32>, vector<1x17xf32> -> vector<1x128xf32>
    %75 = arith.index_cast %c0_i32 : i32 to index
    %c0_32 = arith.constant 0 : index
    %76 = vector.load %arg13[%75, %c0_32] : memref<1x128xf32, #tpu.memory_space<vmem>>, vector<1x128xf32>
    tpu.vector_store %arg13[%75, %c0_32], %74 {strides = array<i32>} : memref<1x128xf32, #tpu.memory_space<vmem>>, vector<1x128xf32>,
    %c1_i32 = arith.constant 1 : i32
    return
  }
  func.func @transform_0(%arg0: i32, %arg1: memref<1xi32, #tpu.memory_space<smem>>) -> (i32, i32) {
    %c0_i32 = arith.constant 0 : i32
    %c0_i32_0 = arith.constant 0 : i32
    %c0_i32_1 = arith.constant 0 : i32
    return %c0_i32, %c0_i32_0 : i32, i32
  }
  func.func @transform_1(%arg0: i32, %arg1: memref<1xi32, #tpu.memory_space<smem>>) -> (i32, i32) {
    %c0_i32 = arith.constant 0 : i32
    %c0_i32_0 = arith.constant 0 : i32
    %c0_i32_1 = arith.constant 0 : i32
    return %c0_i32, %c0_i32_0 : i32, i32
  }
  func.func @transform_2(%arg0: i32, %arg1: memref<1xi32, #tpu.memory_space<smem>>) -> (i32, i32) {
    %c0_i32 = arith.constant 0 : i32
    %c0_i32_0 = arith.constant 0 : i32
    %c0_i32_1 = arith.constant 0 : i32
    return %c0_i32, %c0_i32_0 : i32, i32
  }
  func.func @transform_3(%arg0: i32, %arg1: memref<1xi32, #tpu.memory_space<smem>>) -> (i32, i32) {
    %c0_i32 = arith.constant 0 : i32
    %c0_i32_0 = arith.constant 0 : i32
    %c0_i32_1 = arith.constant 0 : i32
    return %c0_i32, %c0_i32_0 : i32, i32
  }
  func.func @transform_4(%arg0: i32, %arg1: memref<1xi32, #tpu.memory_space<smem>>) -> (i32, i32) {
    %c0_i32 = arith.constant 0 : i32
    %c0_i32_0 = arith.constant 0 : i32
    %c0_i32_1 = arith.constant 0 : i32
    return %c0_i32, %c0_i32_0 : i32, i32
  }
  func.func @transform_5(%arg0: i32, %arg1: memref<1xi32, #tpu.memory_space<smem>>) -> (i32, i32) {
    %c0_i32 = arith.constant 0 : i32
    %c0_i32_0 = arith.constant 0 : i32
    %c0_i32_1 = arith.constant 0 : i32
    return %c0_i32, %c0_i32_0 : i32, i32
  }
  func.func @transform_6(%arg0: i32, %arg1: memref<1xi32, #tpu.memory_space<smem>>) -> (i32, i32) {
    %c0_i32 = arith.constant 0 : i32
    %c0_i32_0 = arith.constant 0 : i32
    %c0_i32_1 = arith.constant 0 : i32
    return %c0_i32, %c0_i32_0 : i32, i32
  }
  func.func @transform_7(%arg0: i32, %arg1: memref<1xi32, #tpu.memory_space<smem>>) -> (i32, i32) {
    %c0_i32 = arith.constant 0 : i32
    %c0_i32_0 = arith.constant 0 : i32
    %c0_i32_1 = arith.constant 0 : i32
    return %c0_i32, %c0_i32_0 : i32, i32
  }
  func.func @transform_8(%arg0: i32, %arg1: memref<1xi32, #tpu.memory_space<smem>>) -> (i32, i32) {
    %c0_i32 = arith.constant 0 : i32
    %c0_i32_0 = arith.constant 0 : i32
    %c0_i32_1 = arith.constant 0 : i32
    return %c0_i32, %c0_i32_0 : i32, i32
  }
  func.func @transform_9(%arg0: i32, %arg1: memref<1xi32, #tpu.memory_space<smem>>) -> (i32, i32) {
    %c0_i32 = arith.constant 0 : i32
    %c0_i32_0 = arith.constant 0 : i32
    %c0_i32_1 = arith.constant 0 : i32
    return %c0_i32, %c0_i32_0 : i32, i32
  }
  func.func @transform_10(%arg0: i32, %arg1: memref<1xi32, #tpu.memory_space<smem>>) -> (i32, i32) {
    %c0_i32 = arith.constant 0 : i32
    %c0_i32_0 = arith.constant 0 : i32
    %c0_i32_1 = arith.constant 0 : i32
    return %c0_i32, %c0_i32_0 : i32, i32
  }
  func.func @transform_11(%arg0: i32, %arg1: memref<1xi32, #tpu.memory_space<smem>>) -> (i32, i32) {
    %c0_i32 = arith.constant 0 : i32
    %c0_i32_0 = arith.constant 0 : i32
    %c0_i32_1 = arith.constant 0 : i32
    return %c0_i32, %c0_i32_0 : i32, i32
  }
}

</mosaic_0001>

<llo_original>
// kernel: tpu_custom_call.1
$region0: #{tpu_custom_call.1}
  #allocation0 [shape = 'u32[]', space=smem, size = 0x4, offset = 0x4, fixed_abs, tag = 'smem constant byte address 0x4 - core index']
  #allocation1 [shape = 'u32[144,128]{1,0:T(1,128)}', space=vmem, size = 0x12000, scoped, tag = 'internal scratch']
  #allocation2 [shape = 's32[1]{0}', space=sflag, size = 0x4, scoped, tag = 'scoped memory for tpu_custom_call.1']
  #allocation3 [shape = 's32[1]{0:T(128)S(6)}', space=smem, size = 0x200, scoped, tag = 'prefetched SMEM operand 0']
  %s0 = inlined_call_operand.<no memory space> [shape: s32[1], index: 0, kind: input, shape index: {}]
  %s1 = inlined_call_operand.vmem [shape: f32[64,32], index: 1, kind: input, shape index: {}]
  %s2 = inlined_call_operand.vmem [shape: f32[1,32], index: 2, kind: input, shape index: {}]
  %s3 = inlined_call_operand.hbm [shape: f32[15,32], index: 3, kind: input, shape index: {}]
  %s4 = inlined_call_operand.vmem [shape: f32[64,143], index: 4, kind: input, shape index: {}]
  %s5 = inlined_call_operand.vmem [shape: f32[1,15], index: 5, kind: input, shape index: {}]
  %s6 = inlined_call_operand.vmem [shape: f32[64,32], index: 6, kind: input, shape index: {}]
  %s7 = inlined_call_operand.hbm [shape: f32[1,32], index: 7, kind: input, shape index: {}]
  %s8 = inlined_call_operand.vmem [shape: f32[32,128], index: 8, kind: input, shape index: {}]
  %s9 = inlined_call_operand.hbm [shape: f32[1,128], index: 9, kind: input, shape index: {}]
  %s10 = inlined_call_operand.vmem [shape: f32[32,64], index: 10, kind: input, shape index: {}]
  %s11 = inlined_call_operand.vmem [shape: f32[1,64], index: 11, kind: input, shape index: {}]
  %s12 = inlined_call_operand.hbm [shape: f32[1,128], index: 12, kind: output, shape index: {}]
  %s13 = sld [smem:[#allocation0]]
  $region66: #{tpu_custom_call.1} parent=0
    _
  %s15 = ssub.s32 1, %s13
  %s16 = scalar_select 0, %s15, %s13
  %17 = sst [smem:[#allocation3]] %s0
  $region1: #{tpu_custom_call.1} parent=0
    #allocation4 [shape = 'u8[8192]{0}', space=vmem, size = 0x2000, scoped, tag = 'input window, operand 3, single buffered']
    #allocation5 [shape = 's32[1]{0}', space=sflag, size = 0x4, scoped, tag = 'scoped memory for tpu_custom_call.1']
    #allocation6 [shape = 's32[1]{0}', space=sflag, size = 0x4, scoped, tag = 'scoped memory for tpu_custom_call.1']
    #allocation7 [shape = 'u8[512]{0}', space=vmem, size = 0x400, scoped, tag = 'input window, operand 7, single buffered']
    #allocation8 [shape = 's32[1]{0}', space=sflag, size = 0x4, scoped, tag = 'scoped memory for tpu_custom_call.1']
    #allocation9 [shape = 'u8[512]{0}', space=vmem, size = 0x400, scoped, tag = 'input window, operand 9, single buffered']
    #allocation10 [shape = 'u8[512]{0}', space=vmem, size = 0x400, scoped, tag = 'output window, operand 0, single buffered']
    %18 = vsyncpa [#allocation5], 0
    %19 = vsyncpa [#allocation8], 0
    %20 = vsyncpa [#allocation6], 0
    // Predicated region
    $region2: #{tpu_custom_call.1} parent=1 // pred_check
      _
    $region3: #{tpu_custom_call.1} parent=1 // pred_check_branch
      %22 = sbr.rel (0) target = $region5
    $region4: #{tpu_custom_call.1} parent=1 // pred_region
      _
    $region5: #{tpu_custom_call.1} parent=1 // pred_fallthru
      _
    // Predicated region
    $region6: #{tpu_custom_call.1} parent=1 // pred_check
      _
    $region7: #{tpu_custom_call.1} parent=1 // pred_check_branch
      %24 = sbr.rel (0) target = $region9
    $region8: #{tpu_custom_call.1} parent=1 // pred_region
      _
    $region9: #{tpu_custom_call.1} parent=1 // pred_fallthru
      _
    // Predicated region
    $region10: #{tpu_custom_call.1} parent=1 // pred_check
      _
    $region11: #{tpu_custom_call.1} parent=1 // pred_check_branch
      %26 = sbr.rel (0) target = $region13
    $region12: #{tpu_custom_call.1} parent=1 // pred_region
      %s28 = ssub.s32 256, 256
      %29 = vsyncadd [#allocation5], %s28
      %s30 = sshll.u32 [#allocation4], 4
      %s31 = int_to_ptr.vmem [resolvable:$true] %s30
      %36 = dma.hbm_to_vmem [thread:$0]  %s3, 256, %s31, [#allocation5], 128, 128, 8
    $region13: #{tpu_custom_call.1} parent=1 // pred_fallthru
      _
    // Predicated region
    $region14: #{tpu_custom_call.1} parent=1 // pred_check
      _
    $region15: #{tpu_custom_call.1} parent=1 // pred_check_branch
      %38 = sbr.rel (0) target = $region17
    $region16: #{tpu_custom_call.1} parent=1 // pred_region
      _
    $region17: #{tpu_custom_call.1} parent=1 // pred_fallthru
      _
    // Predicated region
    $region18: #{tpu_custom_call.1} parent=1 // pred_check
      _
    $region19: #{tpu_custom_call.1} parent=1 // pred_check_branch
      %40 = sbr.rel (0) target = $region21
    $region20: #{tpu_custom_call.1} parent=1 // pred_region
      _
    $region21: #{tpu_custom_call.1} parent=1 // pred_fallthru
      _
    // Predicated region
    $region22: #{tpu_custom_call.1} parent=1 // pred_check
      _
    $region23: #{tpu_custom_call.1} parent=1 // pred_check_branch
      %42 = sbr.rel (0) target = $region25
    $region24: #{tpu_custom_call.1} parent=1 // pred_region
      _
    $region25: #{tpu_custom_call.1} parent=1 // pred_fallthru
      _
    // Predicated region
    $region26: #{tpu_custom_call.1} parent=1 // pred_check
      _
    $region27: #{tpu_custom_call.1} parent=1 // pred_check_branch
      %44 = sbr.rel (0) target = $region29
    $region28: #{tpu_custom_call.1} parent=1 // pred_region
      %s46 = ssub.s32 16, 16
      %47 = vsyncadd [#allocation8], %s46
      %s49 = sshll.u32 [#allocation7], 4
      %s50 = int_to_ptr.vmem [resolvable:$true] %s49
      %52 = dma.hbm_to_vmem [thread:$0]  %s7, 16, %s50, [#allocation8]
    $region29: #{tpu_custom_call.1} parent=1 // pred_fallthru
      _
    // Predicated region
    $region30: #{tpu_custom_call.1} parent=1 // pred_check
      _
    $region31: #{tpu_custom_call.1} parent=1 // pred_check_branch
      %54 = sbr.rel (0) target = $region33
    $region32: #{tpu_custom_call.1} parent=1 // pred_region
      _
    $region33: #{tpu_custom_call.1} parent=1 // pred_fallthru
      _
    // Predicated region
    $region34: #{tpu_custom_call.1} parent=1 // pred_check
      _
    $region35: #{tpu_custom_call.1} parent=1 // pred_check_branch
      %56 = sbr.rel (0) target = $region37
    $region36: #{tpu_custom_call.1} parent=1 // pred_region
      %s58 = ssub.s32 16, 16
      %59 = vsyncadd [#allocation8], %s58
      %s61 = sshll.u32 [#allocation9], 4
      %s62 = int_to_ptr.vmem [resolvable:$true] %s61
      %64 = dma.hbm_to_vmem [thread:$0]  %s9, 16, %s62, [#allocation8]
    $region37: #{tpu_custom_call.1} parent=1 // pred_fallthru
      _
    // Predicated region
    $region38: #{tpu_custom_call.1} parent=1 // pred_check
      _
    $region39: #{tpu_custom_call.1} parent=1 // pred_check_branch
      %66 = sbr.rel (0) target = $region41
    $region40: #{tpu_custom_call.1} parent=1 // pred_region
      _
    $region41: #{tpu_custom_call.1} parent=1 // pred_fallthru
      _
    // Predicated region
    $region42: #{tpu_custom_call.1} parent=1 // pred_check
      _
    $region43: #{tpu_custom_call.1} parent=1 // pred_check_branch
      %68 = sbr.rel (0) target = $region45
    $region44: #{tpu_custom_call.1} parent=1 // pred_region
      _
    $region45: #{tpu_custom_call.1} parent=1 // pred_fallthru
      _
    // Predicated region
    $region46: #{tpu_custom_call.1} parent=1 // pred_check
      _
    $region47: #{tpu_custom_call.1} parent=1 // pred_check_branch
      %70 = sbr.rel (0) target = $region49
    $region48: #{tpu_custom_call.1} parent=1 // pred_region
      %71 = dma.done [#allocation5], 256
    $region49: #{tpu_custom_call.1} parent=1 // pred_fallthru
      _
    // Predicated region
    $region50: #{tpu_custom_call.1} parent=1 // pred_check
      _
    $region51: #{tpu_custom_call.1} parent=1 // pred_check_branch
      %73 = sbr.rel (0) target = $region53
    $region52: #{tpu_custom_call.1} parent=1 // pred_region
      %74 = dma.done [#allocation8], 16
    $region53: #{tpu_custom_call.1} parent=1 // pred_fallthru
      _
    // Predicated region
    $region54: #{tpu_custom_call.1} parent=1 // pred_check
      _
    $region55: #{tpu_custom_call.1} parent=1 // pred_check_branch
      %76 = sbr.rel (0) target = $region57
    $region56: #{tpu_custom_call.1} parent=1 // pred_region
      %77 = dma.done [#allocation8], 16
    $region57: #{tpu_custom_call.1} parent=1 // pred_fallthru
      _
    %v78 = vld [vmem:[#allocation4] sm:$0xff]
    %v79 = vld [vmem:[#allocation4 + $0x8] sm:$0x7f]
    %v80 = vld [vmem:[%s4] sm:$0xff]
    %v81 = vld [vmem:[%s4 + $0x8] sm:$0xff]
    %v82 = vld [vmem:[%s4 + $0x10] sm:$0xff]
    %v83 = vld [vmem:[%s4 + $0x18] sm:$0xff]
    %v84 = vld [vmem:[%s4 + $0x20] sm:$0xff]
    %v85 = vld [vmem:[%s4 + $0x28] sm:$0xff]
    %v86 = vld [vmem:[%s4 + $0x30] sm:$0xff]
    %v87 = vld [vmem:[%s4 + $0x38] sm:$0xff]
    %v88 = vld [vmem:[%s4 + $0x40] sm:$0xff]
    %v89 = vld [vmem:[%s4 + $0x48] sm:$0xff]
    %v90 = vld [vmem:[%s4 + $0x50] sm:$0xff]
    %v91 = vld [vmem:[%s4 + $0x58] sm:$0xff]
    %v92 = vld [vmem:[%s4 + $0x60] sm:$0xff]
    %v93 = vld [vmem:[%s4 + $0x68] sm:$0xff]
    %v94 = vld [vmem:[%s4 + $0x70] sm:$0xff]
    %v95 = vld [vmem:[%s4 + $0x78] sm:$0xff]
    %v96 = vld [vmem:[%s5] sm:$0x1]
    %v97 = vld [vmem:[%s6] sm:$0xff]
    %v98 = vld [vmem:[%s6 + $0x8] sm:$0xff]
    %v99 = vld [vmem:[%s6 + $0x10] sm:$0xff]
    %v100 = vld [vmem:[%s6 + $0x18] sm:$0xff]
    %v101 = vld [vmem:[%s6 + $0x20] sm:$0xff]
    %v102 = vld [vmem:[%s6 + $0x28] sm:$0xff]
    %v103 = vld [vmem:[%s6 + $0x30] sm:$0xff]
    %v104 = vld [vmem:[%s6 + $0x38] sm:$0xff]
    %v105 = vld [vmem:[#allocation7] sm:$0x1]
    %v106 = vld [vmem:[%s8] sm:$0xff]
    %v107 = vld [vmem:[%s8 + $0x8] sm:$0xff]
    %v108 = vld [vmem:[%s8 + $0x10] sm:$0xff]
    %v109 = vld [vmem:[%s8 + $0x18] sm:$0xff]
    %v110 = vld [vmem:[#allocation9] sm:$0x1]
    %v111 = vld [vmem:[%s10] sm:$0xff]
    %v112 = vld [vmem:[%s10 + $0x8] sm:$0xff]
    %v113 = vld [vmem:[%s10 + $0x10] sm:$0xff]
    %v114 = vld [vmem:[%s10 + $0x18] sm:$0xff]
    %v115 = vld [vmem:[%s11] sm:$0x1]
    %v116 = vld [vmem:[%s2] sm:$0x1]
    %s117 = sld [smem:[#allocation3]]
    %s118 = scalar_lea.vmem %s1, %s117
    %v119 = vld [vmem:[%s118] sm:$0x1]
    %v121 = vlaneseq
    %v122 = vshrl.u32 %v121, 7
    %v123 = vsub.s32 0, %v122
    %v124 = vrot.slane %v116, %v123
    %125 = vrot.lane.b32.xlu0 %v124, 32
    %v126 = vpop.permute.xlu0 %125
    %vm128 = vcmask 261120
    %v129 = vsel %vm128, %v119, %v126
    %vm130 = vcmask 523264
    %v132 = vsel %vm130, %v129, 0
    %134 = vmatprep.subr.mxu0 %v81
    %135 = vmatpush1.msra.mxu0 %v80
    %136 = vmatprep.subr.mxu0 %v83
    %137 = vmatpush1.msra.mxu0 %v82
    %138 = vmatprep.subr.mxu0 %v85
    %139 = vmatpush1.msra.mxu0 %v84
    %140 = vmatprep.subr.mxu0 %v87
    %141 = vmatpush1.msra.mxu0 %v86
    %142 = vmatprep.subr.mxu0 %v89
    %143 = vmatpush1.msra.mxu0 %v88
    %144 = vmatprep.subr.mxu0 %v91
    %145 = vmatpush1.msra.mxu0 %v90
    %146 = vmatprep.subr.mxu0 %v93
    %147 = vmatpush1.msra.mxu0 %v92
    %148 = vmatprep.subr.mxu0 %v95
    %149 = vmatpush1.msra.mxu0 %v94
    %150 = vmatprep.subr.mxu0 0.0
    %151 = vmatpush1.msra.mxu0 0.0
    %152 = vmatprep.subr.mxu0 0.0
    %153 = vmatpush1.msra.mxu0 0.0
    %154 = vmatprep.subr.mxu0 0.0
    %155 = vmatpush1.msra.mxu0 0.0
    %156 = vmatprep.subr.mxu0 0.0
    %157 = vmatpush1.msra.mxu0 0.0
    %158 = vmatprep.subr.mxu0 0.0
    %159 = vmatpush1.msra.mxu0 0.0
    %160 = vmatprep.subr.mxu0 0.0
    %161 = vmatpush1.msra.mxu0 0.0
    %162 = vmatprep.subr.mxu0 0.0
    %163 = vmatpush1.msra.mxu0 0.0
    %164 = vmatprep.subr.mxu0 0.0
    %165 = vmatpush1.msra.mxu0 0.0
    %166 = vmatprep.subr.mxu0 0.0
    %167 = vmatpush1.msra.mxu0 0.0
    %168 = vmatprep.subr.mxu0 0.0
    %169 = vmatpush1.msra.mxu0 0.0
    %170 = vmatprep.subr.mxu0 0.0
    %171 = vmatpush1.msra.mxu0 0.0
    %172 = vmatprep.subr.mxu0 0.0
    %173 = vmatpush1.msra.mxu0 0.0
    %174 = vmatprep.subr.mxu0 0.0
    %175 = vmatpush1.msra.mxu0 0.0
    %176 = vmatprep.subr.mxu0 0.0
    %177 = vmatpush1.msra.mxu0 0.0
    %178 = vmatprep.subr.mxu0 0.0
    %179 = vmatpush1.msra.mxu0 0.0
    %180 = vmatprep.subr.mxu0 0.0
    %181 = vmatpush1.msra.mxu0 0.0
    %182 = vmatprep.subr.mxu0 0.0
    %183 = vmatpush1.msra.mxu0 0.0
    %184 = vmatprep.subr.mxu0 0.0
    %185 = vmatpush1.msra.mxu0 0.0
    %186 = vmatprep.subr.mxu0 0.0
    %187 = vmatpush1.msra.mxu0 0.0
    %188 = vmatprep.subr.mxu0 0.0
    %189 = vmatpush1.msra.mxu0 0.0
    %190 = vmatprep.subr.mxu0 0.0
    %191 = vmatpush1.msra.mxu0 0.0
    %192 = vmatprep.subr.mxu0 0.0
    %193 = vmatpush1.msra.mxu0 0.0
    %194 = vmatprep.subr.mxu0 0.0
    %195 = vmatpush1.msra.mxu0 0.0
    %196 = vmatprep.subr.mxu0 0.0
    %197 = vmatpush1.msra.mxu0 0.0
    %198 = vmatprep.mubr.f32.mxu0 0.0
    %199 = vmatmul.mubr.f32.gmra.mrb[0].mxu0 %v132
    %v200 = vpop.f32.mrb[0].mxu0
    %v201 = vadd.f32 0.0, %v200
    %v202 = vpop.f32.mrb[0].mxu0
    %v203 = vadd.f32 0.0, %v202
    %204 = vdwg.mxu0
    %v205 = vadd.f32 %v203, %v96
    %vm206 = vcmask 114688
    %v207 = vsel %vm206, %v205, -inf
    %208 = vmax.xlane.f32.xlu0 %v207
    %v209 = vpop.xlane.xlu0 %208
    %v210 = vsub.f32 %v205, %v209
    %v211 = vmul.f32 %v210, 1.442695
    %v212 = vpow.pop %v211
    %v213 = vsel %vm206, %v212, 0.0
    %214 = vadd.xlane.f32.xlu0 %v213
    %v215 = vpop.xlane.xlu0 %214
    %v216 = vrcp.pop %v215
    %v217 = vmul.f32 %v212, %v216
    %vm218 = vcmask 121856
    %v220 = vsel %vm218, %v217, 0
    %vm222 = vcmask 1046528
    %v224 = vsel %vm222, %v79, 0
    %226 = vmatprep.subr.mxu0 0.0
    %227 = vmatpush1.msra.mxu0 %v78
    %228 = vmatprep.subr.mxu0 0.0
    %229 = vmatpush1.msra.mxu0 %v224
    %230 = vmatprep.subr.mxu0 0.0
    %231 = vmatpush1.msra.mxu0 0.0
    %232 = vmatprep.subr.mxu0 0.0
    %233 = vmatpush1.msra.mxu0 0.0
    %234 = vmatprep.subr.mxu0 0.0
    %235 = vmatpush1.msra.mxu0 0.0
    %236 = vmatprep.subr.mxu0 0.0
    %237 = vmatpush1.msra.mxu0 0.0
    %238 = vmatprep.subr.mxu0 0.0
    %239 = vmatpush1.msra.mxu0 0.0
    %240 = vmatprep.subr.mxu0 0.0
    %241 = vmatpush1.msra.mxu0 0.0
    %242 = vmatprep.subr.mxu0 0.0
    %243 = vmatpush1.msra.mxu0 0.0
    %244 = vmatprep.subr.mxu0 0.0
    %245 = vmatpush1.msra.mxu0 0.0
    %246 = vmatprep.subr.mxu0 0.0
    %247 = vmatpush1.msra.mxu0 0.0
    %248 = vmatprep.subr.mxu0 0.0
    %249 = vmatpush1.msra.mxu0 0.0
    %250 = vmatprep.subr.mxu0 0.0
    %251 = vmatpush1.msra.mxu0 0.0
    %252 = vmatprep.subr.mxu0 0.0
    %253 = vmatpush1.msra.mxu0 0.0
    %254 = vmatprep.subr.mxu0 0.0
    %255 = vmatpush1.msra.mxu0 0.0
    %256 = vmatprep.subr.mxu0 0.0
    %257 = vmatpush1.msra.mxu0 0.0
    %258 = vmatprep.subr.mxu0 0.0
    %259 = vmatpush1.msra.mxu0 0.0
    %260 = vmatprep.subr.mxu0 0.0
    %261 = vmatpush1.msra.mxu0 0.0
    %262 = vmatprep.subr.mxu0 0.0
    %263 = vmatpush1.msra.mxu0 0.0
    %264 = vmatprep.subr.mxu0 0.0
    %265 = vmatpush1.msra.mxu0 0.0
    %266 = vmatprep.subr.mxu0 0.0
    %267 = vmatpush1.msra.mxu0 0.0
    %268 = vmatprep.subr.mxu0 0.0
    %269 = vmatpush1.msra.mxu0 0.0
    %270 = vmatprep.subr.mxu0 0.0
    %271 = vmatpush1.msra.mxu0 0.0
    %272 = vmatprep.subr.mxu0 0.0
    %273 = vmatpush1.msra.mxu0 0.0
    %274 = vmatprep.subr.mxu0 0.0
    %275 = vmatpush1.msra.mxu0 0.0
    %276 = vmatprep.subr.mxu0 0.0
    %277 = vmatpush1.msra.mxu0 0.0
    %278 = vmatprep.subr.mxu0 0.0
    %279 = vmatpush1.msra.mxu0 0.0
    %280 = vmatprep.subr.mxu0 0.0
    %281 = vmatpush1.msra.mxu0 0.0
    %282 = vmatprep.subr.mxu0 0.0
    %283 = vmatpush1.msra.mxu0 0.0
    %284 = vmatprep.subr.mxu0 0.0
    %285 = vmatpush1.msra.mxu0 0.0
    %286 = vmatprep.subr.mxu0 0.0
    %287 = vmatpush1.msra.mxu0 0.0
    %288 = vmatprep.subr.mxu0 0.0
    %289 = vmatpush1.msra.mxu0 0.0
    %290 = vmatprep.mubr.f32.mxu0 0.0
    %291 = vmatmul.mubr.f32.gmra.mrb[0].mxu0 %v220
    %v292 = vpop.f32.mrb[0].mxu0
    %v293 = vadd.f32 0.0, %v292
    %v294 = vpop.f32.mrb[0].mxu0
    %295 = vdwg.mxu0
    %297 = vrot.lane.b32.xlu0 %v293, 32
    %v298 = vpop.permute.xlu0 %297
    %v300 = vsel %vm128, %v119, %v298
    %v302 = vsel %vm130, %v300, 0
    %304 = vmatprep.subr.mxu0 0.0
    %305 = vmatpush1.msra.mxu0 %v97
    %306 = vmatprep.subr.mxu0 0.0
    %307 = vmatpush1.msra.mxu0 %v98
    %308 = vmatprep.subr.mxu0 0.0
    %309 = vmatpush1.msra.mxu0 %v99
    %310 = vmatprep.subr.mxu0 0.0
    %311 = vmatpush1.msra.mxu0 %v100
    %312 = vmatprep.subr.mxu0 0.0
    %313 = vmatpush1.msra.mxu0 %v101
    %314 = vmatprep.subr.mxu0 0.0
    %315 = vmatpush1.msra.mxu0 %v102
    %316 = vmatprep.subr.mxu0 0.0
    %317 = vmatpush1.msra.mxu0 %v103
    %318 = vmatprep.subr.mxu0 0.0
    %319 = vmatpush1.msra.mxu0 %v104
    %320 = vmatprep.subr.mxu0 0.0
    %321 = vmatpush1.msra.mxu0 0.0
    %322 = vmatprep.subr.mxu0 0.0
    %323 = vmatpush1.msra.mxu0 0.0
    %324 = vmatprep.subr.mxu0 0.0
    %325 = vmatpush1.msra.mxu0 0.0
    %326 = vmatprep.subr.mxu0 0.0
    %327 = vmatpush1.msra.mxu0 0.0
    %328 = vmatprep.subr.mxu0 0.0
    %329 = vmatpush1.msra.mxu0 0.0
    %330 = vmatprep.subr.mxu0 0.0
    %331 = vmatpush1.msra.mxu0 0.0
    %332 = vmatprep.subr.mxu0 0.0
    %333 = vmatpush1.msra.mxu0 0.0
    %334 = vmatprep.subr.mxu0 0.0
    %335 = vmatpush1.msra.mxu0 0.0
    %336 = vmatprep.subr.mxu0 0.0
    %337 = vmatpush1.msra.mxu0 0.0
    %338 = vmatprep.subr.mxu0 0.0
    %339 = vmatpush1.msra.mxu0 0.0
    %340 = vmatprep.subr.mxu0 0.0
    %341 = vmatpush1.msra.mxu0 0.0
    %342 = vmatprep.subr.mxu0 0.0
    %343 = vmatpush1.msra.mxu0 0.0
    %344 = vmatprep.subr.mxu0 0.0
    %345 = vmatpush1.msra.mxu0 0.0
    %346 = vmatprep.subr.mxu0 0.0
    %347 = vmatpush1.msra.mxu0 0.0
    %348 = vmatprep.subr.mxu0 0.0
    %349 = vmatpush1.msra.mxu0 0.0
    %350 = vmatprep.subr.mxu0 0.0
    %351 = vmatpush1.msra.mxu0 0.0
    %352 = vmatprep.subr.mxu0 0.0
    %353 = vmatpush1.msra.mxu0 0.0
    %354 = vmatprep.subr.mxu0 0.0
    %355 = vmatpush1.msra.mxu0 0.0
    %356 = vmatprep.subr.mxu0 0.0
    %357 = vmatpush1.msra.mxu0 0.0
    %358 = vmatprep.subr.mxu0 0.0
    %359 = vmatpush1.msra.mxu0 0.0
    %360 = vmatprep.subr.mxu0 0.0
    %361 = vmatpush1.msra.mxu0 0.0
    %362 = vmatprep.subr.mxu0 0.0
    %363 = vmatpush1.msra.mxu0 0.0
    %364 = vmatprep.subr.mxu0 0.0
    %365 = vmatpush1.msra.mxu0 0.0
    %366 = vmatprep.subr.mxu0 0.0
    %367 = vmatpush1.msra.mxu0 0.0
    %368 = vmatprep.mubr.f32.mxu0 0.0
    %369 = vmatmul.mubr.f32.gmra.mrb[0].mxu0 %v302
    %v370 = vpop.f32.mrb[0].mxu0
    %v371 = vadd.f32 %v105, %v370
    %v372 = vpop.f32.mrb[0].mxu0
    %373 = vdwg.mxu0
    %v375 = vsel %vm128, %v371, 0
    %377 = vmatprep.subr.mxu0 0.0
    %378 = vmatpush1.msra.mxu0 %v106
    %379 = vmatprep.subr.mxu0 0.0
    %380 = vmatpush1.msra.mxu0 %v107
    %381 = vmatprep.subr.mxu0 0.0
    %382 = vmatpush1.msra.mxu0 %v108
    %383 = vmatprep.subr.mxu0 0.0
    %384 = vmatpush1.msra.mxu0 %v109
    %385 = vmatprep.subr.mxu0 0.0
    %386 = vmatpush1.msra.mxu0 0.0
    %387 = vmatprep.subr.mxu0 0.0
    %388 = vmatpush1.msra.mxu0 0.0
    %389 = vmatprep.subr.mxu0 0.0
    %390 = vmatpush1.msra.mxu0 0.0
    %391 = vmatprep.subr.mxu0 0.0
    %392 = vmatpush1.msra.mxu0 0.0
    %393 = vmatprep.subr.mxu0 0.0
    %394 = vmatpush1.msra.mxu0 0.0
    %395 = vmatprep.subr.mxu0 0.0
    %396 = vmatpush1.msra.mxu0 0.0
    %397 = vmatprep.subr.mxu0 0.0
    %398 = vmatpush1.msra.mxu0 0.0
    %399 = vmatprep.subr.mxu0 0.0
    %400 = vmatpush1.msra.mxu0 0.0
    %401 = vmatprep.subr.mxu0 0.0
    %402 = vmatpush1.msra.mxu0 0.0
    %403 = vmatprep.subr.mxu0 0.0
    %404 = vmatpush1.msra.mxu0 0.0
    %405 = vmatprep.subr.mxu0 0.0
    %406 = vmatpush1.msra.mxu0 0.0
    %407 = vmatprep.subr.mxu0 0.0
    %408 = vmatpush1.msra.mxu0 0.0
    %409 = vmatprep.subr.mxu0 0.0
    %410 = vmatpush1.msra.mxu0 0.0
    %411 = vmatprep.subr.mxu0 0.0
    %412 = vmatpush1.msra.mxu0 0.0
    %413 = vmatprep.subr.mxu0 0.0
    %414 = vmatpush1.msra.mxu0 0.0
    %415 = vmatprep.subr.mxu0 0.0
    %416 = vmatpush1.msra.mxu0 0.0
    %417 = vmatprep.subr.mxu0 0.0
    %418 = vmatpush1.msra.mxu0 0.0
    %419 = vmatprep.subr.mxu0 0.0
    %420 = vmatpush1.msra.mxu0 0.0
    %421 = vmatprep.subr.mxu0 0.0
    %422 = vmatpush1.msra.mxu0 0.0
    %423 = vmatprep.subr.mxu0 0.0
    %424 = vmatpush1.msra.mxu0 0.0
    %425 = vmatprep.subr.mxu0 0.0
    %426 = vmatpush1.msra.mxu0 0.0
    %427 = vmatprep.subr.mxu0 0.0
    %428 = vmatpush1.msra.mxu0 0.0
    %429 = vmatprep.subr.mxu0 0.0
    %430 = vmatpush1.msra.mxu0 0.0
    %431 = vmatprep.subr.mxu0 0.0
    %432 = vmatpush1.msra.mxu0 0.0
    %433 = vmatprep.subr.mxu0 0.0
    %434 = vmatpush1.msra.mxu0 0.0
    %435 = vmatprep.subr.mxu0 0.0
    %436 = vmatpush1.msra.mxu0 0.0
    %437 = vmatprep.subr.mxu0 0.0
    %438 = vmatpush1.msra.mxu0 0.0
    %439 = vmatprep.subr.mxu0 0.0
    %440 = vmatpush1.msra.mxu0 0.0
    %441 = vmatprep.mubr.f32.mxu0 0.0
    %442 = vmatmul.mubr.f32.gmra.mrb[0].mxu0 %v375
    %v443 = vpop.f32.mrb[0].mxu0
    %v444 = vadd.f32 %v201, %v443
    %v445 = vpop.f32.mrb[0].mxu0
    %446 = vdwg.mxu0
    %v447 = vadd.f32 %v444, %v110
    %v448 = vxor.u32 %v447, 2147483648
    %v449 = vmul.f32 %v448, 1.442695
    %v450 = vpow.pop %v449
    %v451 = vadd.f32 %v450, 1.0
    %v452 = vrcp.pop %v451
    %v453 = vmul.f32 1.0, %v452
    %v454 = vtanh.pop %v447
    %v455 = vmul.f32 %v453, %v126
    %457 = vrot.lane.b32.xlu0 %v454, 64
    %v458 = vpop.permute.xlu0 %457
    %v460 = vmul.f32 %v453, %v458
    %462 = vrot.lane.b32.xlu0 %v460, 32
    %v463 = vpop.permute.xlu0 %462
    %v465 = vadd.f32 %v455, %v463
    %v466 = vtanh.pop %v465
    %468 = vrot.lane.b32.xlu0 %v466, 64
    %v469 = vpop.permute.xlu0 %468
    %v471 = vmul.f32 %v453, %v469
    %473 = vrot.lane.b32.xlu0 %v471, 32
    %v474 = vpop.permute.xlu0 %473
    %v475 = vsel %vm128, %v474, 0
    %477 = vmatprep.subr.mxu0 0.0
    %478 = vmatpush1.msra.mxu0 %v111
    %479 = vmatprep.subr.mxu0 0.0
    %480 = vmatpush1.msra.mxu0 %v112
    %481 = vmatprep.subr.mxu0 0.0
    %482 = vmatpush1.msra.mxu0 %v113
    %483 = vmatprep.subr.mxu0 0.0
    %484 = vmatpush1.msra.mxu0 %v114
    %485 = vmatprep.subr.mxu0 0.0
    %486 = vmatpush1.msra.mxu0 0.0
    %487 = vmatprep.subr.mxu0 0.0
    %488 = vmatpush1.msra.mxu0 0.0
    %489 = vmatprep.subr.mxu0 0.0
    %490 = vmatpush1.msra.mxu0 0.0
    %491 = vmatprep.subr.mxu0 0.0
    %492 = vmatpush1.msra.mxu0 0.0
    %493 = vmatprep.subr.mxu0 0.0
    %494 = vmatpush1.msra.mxu0 0.0
    %495 = vmatprep.subr.mxu0 0.0
    %496 = vmatpush1.msra.mxu0 0.0
    %497 = vmatprep.subr.mxu0 0.0
    %498 = vmatpush1.msra.mxu0 0.0
    %499 = vmatprep.subr.mxu0 0.0
    %500 = vmatpush1.msra.mxu0 0.0
    %501 = vmatprep.subr.mxu0 0.0
    %502 = vmatpush1.msra.mxu0 0.0
    %503 = vmatprep.subr.mxu0 0.0
    %504 = vmatpush1.msra.mxu0 0.0
    %505 = vmatprep.subr.mxu0 0.0
    %506 = vmatpush1.msra.mxu0 0.0
    %507 = vmatprep.subr.mxu0 0.0
    %508 = vmatpush1.msra.mxu0 0.0
    %509 = vmatprep.subr.mxu0 0.0
    %510 = vmatpush1.msra.mxu0 0.0
    %511 = vmatprep.subr.mxu0 0.0
    %512 = vmatpush1.msra.mxu0 0.0
    %513 = vmatprep.subr.mxu0 0.0
    %514 = vmatpush1.msra.mxu0 0.0
    %515 = vmatprep.subr.mxu0 0.0
    %516 = vmatpush1.msra.mxu0 0.0
    %517 = vmatprep.subr.mxu0 0.0
    %518 = vmatpush1.msra.mxu0 0.0
    %519 = vmatprep.subr.mxu0 0.0
    %520 = vmatpush1.msra.mxu0 0.0
    %521 = vmatprep.subr.mxu0 0.0
    %522 = vmatpush1.msra.mxu0 0.0
    %523 = vmatprep.subr.mxu0 0.0
    %524 = vmatpush1.msra.mxu0 0.0
    %525 = vmatprep.subr.mxu0 0.0
    %526 = vmatpush1.msra.mxu0 0.0
    %527 = vmatprep.subr.mxu0 0.0
    %528 = vmatpush1.msra.mxu0 0.0
    %529 = vmatprep.subr.mxu0 0.0
    %530 = vmatpush1.msra.mxu0 0.0
    %531 = vmatprep.subr.mxu0 0.0
    %532 = vmatpush1.msra.mxu0 0.0
    %533 = vmatprep.subr.mxu0 0.0
    %534 = vmatpush1.msra.mxu0 0.0
    %535 = vmatprep.subr.mxu0 0.0
    %536 = vmatpush1.msra.mxu0 0.0
    %537 = vmatprep.subr.mxu0 0.0
    %538 = vmatpush1.msra.mxu0 0.0
    %539 = vmatprep.subr.mxu0 0.0
    %540 = vmatpush1.msra.mxu0 0.0
    %541 = vmatprep.mubr.f32.mxu0 0.0
    %542 = vmatmul.mubr.f32.gmra.mrb[0].mxu0 %v475
    %v543 = vpop.f32.mrb[0].mxu0
    %v544 = vadd.f32 %v115, %v543
    %v545 = vpop.f32.mrb[0].mxu0
    %546 = vdwg.mxu0
    %vm547 = vcmask 516096
    %v548 = vsel %vm547, %v544, -inf
    %549 = vmax.xlane.f32.xlu0 %v548
    %v550 = vpop.xlane.xlu0 %549
    %v551 = vsub.f32 %v544, %v550
    %v552 = vmul.f32 %v551, 1.442695
    %v553 = vpow.pop %v552
    %v554 = vsel %vm547, %v553, 0.0
    %555 = vadd.xlane.f32.xlu0 %v554
    %v556 = vpop.xlane.xlu0 %555
    %v557 = vlog2.pop %v556
    %v558 = vmul.f32 %v557, 0.6931472
    %v559 = vsub.f32 %v551, %v558
    %561 = vrot.lane.b32.xlu0 %v465, 32
    %v562 = vpop.permute.xlu0 %561
    %564 = vrot.lane.b32.xlu0 %v217, 96
    %v565 = vpop.permute.xlu0 %564
    %v567 = vsel %vm130, %v559, %v562
    %vm568 = vcmask 785408
    %v569 = vsel %vm568, %v567, %v565
    %vm570 = vcmask 908288
    %v571 = vsel %vm570, %v569, 0.0
    %572 = vst [vmem:[#allocation10] sm:$0x1] %v571
    // Predicated region
    $region58: #{tpu_custom_call.1} parent=1 // pred_check
      _
    $region59: #{tpu_custom_call.1} parent=1 // pred_check_branch
      %574 = sbr.rel (0) target = $region61
    $region60: #{tpu_custom_call.1} parent=1 // pred_region
      %s576 = ssub.s32 16, 16
      %577 = vsyncadd [#allocation6], %s576
      %s579 = sshll.u32 [#allocation10], 4
      %s580 = int_to_ptr.vmem [resolvable:$true] %s579
      %582 = dma.vmem_to_hbm [thread:$0]  %s580, 16, %s12, [#allocation6]
    $region61: #{tpu_custom_call.1} parent=1 // pred_fallthru
      _
    // Predicated region
    $region62: #{tpu_custom_call.1} parent=1 // pred_check
      _
    $region63: #{tpu_custom_call.1} parent=1 // pred_check_branch
      %584 = sbr.rel (0) target = $region65
    $region64: #{tpu_custom_call.1} parent=1 // pred_region
      %585 = dma.done [#allocation6], 16
    $region65: #{tpu_custom_call.1} parent=1 // pred_fallthru
      _
    %586 = vsyncpa [#allocation5], 1
    %587 = vsyncpa [#allocation8], 1
    %588 = vsyncpa [#allocation6], 1

</llo_original>
